<compile_context>
chip_gen: v7x
topology: tpu7x:2x2x1
jax: 0.10.0
libtpu: 0.0.40
codegen_flags: <defaults>
</compile_context>

<pallas_src>
import jax
import jax.numpy as jnp
from jax.experimental import pallas as pl
from jax.experimental.pallas import tpu as pltpu


def _init_embed_kernel(locs_ref, dist_ref, w_ref, b_ref, o_ref):
    # locs_ref: (TM, 2), dist_ref: (TM, 1), w_ref: (3, E), b_ref: (1, E), o_ref: (TM, E)
    lx = locs_ref[:, 0:1].astype(jnp.float32)   # (TM, 1)
    ly = locs_ref[:, 1:2].astype(jnp.float32)   # (TM, 1)
    dd = dist_ref[:, 0:1].astype(jnp.float32)   # (TM, 1)

    w0 = w_ref[0:1, :].astype(jnp.float32)      # (1, E)
    w1 = w_ref[1:2, :].astype(jnp.float32)      # (1, E)
    w2 = w_ref[2:3, :].astype(jnp.float32)      # (1, E)
    b = b_ref[...].astype(jnp.float32)          # (1, E)

    # Three broadcast multiply-adds on the VPU (no MXU for a K=3 contraction).
    acc = lx * w0 + ly * w1 + dd * w2 + b       # (TM, E), f32 accumulation
    o_ref[...] = acc.astype(o_ref.dtype)


def _round_up(a, b):
    return (a + b - 1) // b * b


def spp_init_embedding(locs, manhattan, weight, bias, *, tm=1024):
    """locs: (B, N, 2), manhattan: (B, N, 1), weight: (3, E), bias: (E,).

    Returns (B, N, E) embeddings, matching
      out = Linear(3, E)(cat([locs, manhattan], dim=2)).
    """
    B, N, two = locs.shape
    assert two == 2, f"locs last dim must be 2, got {two}"
    K, E = weight.shape
    assert K == 3, (
        f"weight must be (3, E) -- i.e. transposed from PyTorch's (E, 3) -- got {weight.shape}"
    )
    assert manhattan.shape == (B, N, 1)
    assert bias.shape == (E,)

    M = B * N
    # Contiguous reshapes (no HBM copy); concat is fused inside the kernel.
    locs2 = locs.reshape(M, 2)
    dist2 = manhattan.reshape(M, 1)
    b2d = bias.reshape(1, E)

    # Tile rows: TM is a multiple of 8 and never exceeds the (padded) row count.
    TM = min(tm, _round_up(M, 8))
    M_pad = _round_up(M, TM)
    if M_pad != M:
        pad = M_pad - M
        locs2 = jnp.pad(locs2, ((0, pad), (0, 0)))
        dist2 = jnp.pad(dist2, ((0, pad), (0, 0)))

    grid = (M_pad // TM,)

    # Advisory cost: ~6 VPU ops per output element; HBM traffic = inputs + output + params.
    cost = pl.CostEstimate(
        flops=6 * M_pad * E,
        transcendentals=0,
        bytes_accessed=4 * (M_pad * 3 + M_pad * E + K * E + E),
    )

    out_flat = pl.pallas_call(
        _init_embed_kernel,
        out_shape=jax.ShapeDtypeStruct((M_pad, E), locs.dtype),
        grid_spec=pltpu.PrefetchScalarGridSpec(
            num_scalar_prefetch=0,
            grid=grid,
            in_specs=[
                pl.BlockSpec((TM, 2), lambda i: (i, 0)),   # locs rows (pipelined)
                pl.BlockSpec((TM, 1), lambda i: (i, 0)),   # manhattan rows (pipelined)
                pl.BlockSpec((3, E), lambda i: (0, 0)),    # weight (resident)
                pl.BlockSpec((1, E), lambda i: (0, 0)),    # bias   (resident)
            ],
            out_specs=pl.BlockSpec((TM, E), lambda i: (i, 0)),
        ),
        compiler_params=pltpu.CompilerParams(
            dimension_semantics=("parallel",),
        ),
        cost_estimate=cost,
    )(locs2, dist2, weight, b2d)

    return out_flat[:M].reshape(B, N, E)


def reference(locs, manhattan, weight, bias):
    x = jnp.concatenate([locs, manhattan], axis=2)
    return jnp.einsum("bnk,ke->bne", x, weight) + bias


if __name__ == "__main__":
    # Small deterministic example: batch=2, nodes=8, embedding_dim=32.
    B, N, E = 2, 8, 32
    node_dim = 3

    key = jax.random.PRNGKey(0)
    k_locs, k_dist, k_w, k_b = jax.random.split(key, 4)

    locs = jax.random.uniform(k_locs, (B, N, 2), dtype=jnp.float32)
    manhattan = jax.random.uniform(k_dist, (B, N, 1), dtype=jnp.float32)

    # Deterministic parameter init mimicking nn.Linear's uniform(-1/sqrt(K), 1/sqrt(K)).
    bound = 1.0 / jnp.sqrt(jnp.float32(node_dim))
    weight = jax.random.uniform(
        k_w, (node_dim, E), minval=-bound, maxval=bound, dtype=jnp.float32
    )
    bias = jax.random.uniform(
        k_b, (E,), minval=-bound, maxval=bound, dtype=jnp.float32
    )

    out = spp_init_embedding(locs, manhattan, weight, bias)
    out = jax.block_until_ready(out)

    ref = reference(locs, manhattan, weight, bias)
    assert out.shape == (B, N, E)
    assert jnp.allclose(out, ref, atol=1e-5, rtol=1e-5), "mismatch vs reference"

    # Also exercise a ragged, multi-tile row count to cover the padded-tail path.
    B2, N2 = 3, 700  # M = 2100, not a multiple of TM=1024
    kl2, kd2 = jax.random.split(jax.random.PRNGKey(1), 2)
    locs2 = jax.random.uniform(kl2, (B2, N2, 2), dtype=jnp.float32)
    man2 = jax.random.uniform(kd2, (B2, N2, 1), dtype=jnp.float32)
    out2 = jax.block_until_ready(spp_init_embedding(locs2, man2, weight, bias))
    ref2 = reference(locs2, man2, weight, bias)
    assert out2.shape == (B2, N2, E)
    assert jnp.allclose(out2, ref2, atol=1e-5, rtol=1e-5), "mismatch vs reference (ragged)"

    print("KERNEL_OK")
</pallas_src>

<mosaic_0001>
module attributes {stable_mosaic.version = 11 : i64} {
  func.func @_init_embed_kernel(%arg0: i32, %arg1: memref<16x2xf32, #tpu.memory_space<vmem>>, %arg2: memref<16x1xf32, #tpu.memory_space<vmem>>, %arg3: memref<3x32xf32, #tpu.memory_space<vmem>>, %arg4: memref<1x32xf32, #tpu.memory_space<vmem>>, %arg5: memref<16x32xf32, #tpu.memory_space<vmem>>) attributes {dimension_semantics = [#tpu.dimension_semantics<parallel>], iteration_bounds = array<i64: 1>, scalar_prefetch = 0 : i64, scratch_operands = 0 : i64, tpu.core_type = #tpu.core_type<tc>, window_params = [{transform_indices = @transform_0, window_bounds = array<i64: 16, 2>}, {transform_indices = @transform_1, window_bounds = array<i64: 16, 1>}, {pipeline_mode = #tpu.pipeline_mode<synchronous>, transform_indices = @transform_2, window_bounds = array<i64: 3, 32>}, {pipeline_mode = #tpu.pipeline_mode<synchronous>, transform_indices = @transform_3, window_bounds = array<i64: 1, 32>}, {transform_indices = @transform_4, window_bounds = array<i64: 16, 32>}]} {
    %c0 = arith.constant 0 : index
    %c0_0 = arith.constant 0 : index
    %0 = vector.load %arg1[%c0, %c0_0] : memref<16x2xf32, #tpu.memory_space<vmem>>, vector<16x1xf32>
    %c0_1 = arith.constant 0 : index
    %c1 = arith.constant 1 : index
    %1 = vector.load %arg1[%c0_1, %c1] : memref<16x2xf32, #tpu.memory_space<vmem>>, vector<16x1xf32>
    %c0_2 = arith.constant 0 : index
    %c0_3 = arith.constant 0 : index
    %2 = vector.load %arg2[%c0_2, %c0_3] : memref<16x1xf32, #tpu.memory_space<vmem>>, vector<16x1xf32>
    %c0_4 = arith.constant 0 : index
    %c0_5 = arith.constant 0 : index
    %3 = vector.load %arg3[%c0_4, %c0_5] : memref<3x32xf32, #tpu.memory_space<vmem>>, vector<1x32xf32>
    %c1_6 = arith.constant 1 : index
    %c0_7 = arith.constant 0 : index
    %4 = vector.load %arg3[%c1_6, %c0_7] : memref<3x32xf32, #tpu.memory_space<vmem>>, vector<1x32xf32>
    %c2 = arith.constant 2 : index
    %c0_8 = arith.constant 0 : index
    %5 = vector.load %arg3[%c2, %c0_8] : memref<3x32xf32, #tpu.memory_space<vmem>>, vector<1x32xf32>
    %c0_9 = arith.constant 0 : index
    %c0_10 = arith.constant 0 : index
    %6 = vector.load %arg4[%c0_9, %c0_10] : memref<1x32xf32, #tpu.memory_space<vmem>>, vector<1x32xf32>
    %7 = vector.broadcast %0 : vector<16x1xf32> to vector<16x32xf32>
    %8 = vector.broadcast %3 : vector<1x32xf32> to vector<16x32xf32>
    %9 = arith.mulf %7, %8 : vector<16x32xf32>
    %10 = vector.broadcast %1 : vector<16x1xf32> to vector<16x32xf32>
    %11 = vector.broadcast %4 : vector<1x32xf32> to vector<16x32xf32>
    %12 = arith.mulf %10, %11 : vector<16x32xf32>
    %13 = arith.addf %9, %12 : vector<16x32xf32>
    %14 = vector.broadcast %2 : vector<16x1xf32> to vector<16x32xf32>
    %15 = vector.broadcast %5 : vector<1x32xf32> to vector<16x32xf32>
    %16 = arith.mulf %14, %15 : vector<16x32xf32>
    %17 = arith.addf %13, %16 : vector<16x32xf32>
    %18 = vector.broadcast %6 : vector<1x32xf32> to vector<16x32xf32>
    %19 = arith.addf %17, %18 : vector<16x32xf32>
    %c0_11 = arith.constant 0 : index
    %c0_12 = arith.constant 0 : index
    %20 = vector.load %arg5[%c0_11, %c0_12] : memref<16x32xf32, #tpu.memory_space<vmem>>, vector<16x32xf32>
    tpu.vector_store %arg5[%c0_11, %c0_12], %19 {strides = array<i32>} : memref<16x32xf32, #tpu.memory_space<vmem>>, vector<16x32xf32>,
    return
  }
  func.func @transform_0(%arg0: i32) -> (i32, i32) {
    %c0_i32 = arith.constant 0 : i32
    %c0_i32_0 = arith.constant 0 : i32
    return %arg0, %c0_i32 : i32, i32
  }
  func.func @transform_1(%arg0: i32) -> (i32, i32) {
    %c0_i32 = arith.constant 0 : i32
    %c0_i32_0 = arith.constant 0 : i32
    return %arg0, %c0_i32 : i32, i32
  }
  func.func @transform_2(%arg0: i32) -> (i32, i32) {
    %c0_i32 = arith.constant 0 : i32
    %c0_i32_0 = arith.constant 0 : i32
    %c0_i32_1 = arith.constant 0 : i32
    return %c0_i32, %c0_i32_0 : i32, i32
  }
  func.func @transform_3(%arg0: i32) -> (i32, i32) {
    %c0_i32 = arith.constant 0 : i32
    %c0_i32_0 = arith.constant 0 : i32
    %c0_i32_1 = arith.constant 0 : i32
    return %c0_i32, %c0_i32_0 : i32, i32
  }
  func.func @transform_4(%arg0: i32) -> (i32, i32) {
    %c0_i32 = arith.constant 0 : i32
    %c0_i32_0 = arith.constant 0 : i32
    return %arg0, %c0_i32 : i32, i32
  }
}

</mosaic_0001>

<llo_original>
// kernel: tpu_custom_call.1
$region0: #{tpu_custom_call.1}
  #allocation0 [shape = 'u32[]', space=smem, size = 0x4, offset = 0x4, fixed_abs, tag = 'smem constant byte address 0x4 - core index']
  #allocation1 [shape = 'u32[144,128]{1,0:T(1,128)}', space=vmem, size = 0x12000, scoped, tag = 'internal scratch']
  %s0 = inlined_call_operand.vmem [shape: f32[16,2], index: 0, kind: input, shape index: {}]
  %s1 = inlined_call_operand.vmem [shape: f32[16,1], index: 1, kind: input, shape index: {}]
  %s2 = inlined_call_operand.vmem [shape: f32[3,32], index: 2, kind: input, shape index: {}]
  %s3 = inlined_call_operand.vmem [shape: f32[1,32], index: 3, kind: input, shape index: {}]
  %s4 = inlined_call_operand.hbm [shape: f32[16,32], index: 4, kind: output, shape index: {}]
  %s5 = sld [smem:[#allocation0]]
  $region26: #{tpu_custom_call.1} parent=0
    _
  %s7 = ssub.s32 1, %s5
  %s8 = scalar_select 0, %s7, %s5
  $region1: #{tpu_custom_call.1} parent=0
    #allocation2 [shape = 'u8[8192]{0}', space=vmem, size = 0x2000, scoped, tag = 'output window, operand 0, single buffered']
    #allocation3 [shape = 's32[1]{0}', space=sflag, size = 0x4, scoped, tag = 'scoped memory for tpu_custom_call.1']
    %9 = vsyncpa [#allocation3], 0
    // Predicated region
    $region2: #{tpu_custom_call.1} parent=1 // pred_check
      _
    $region3: #{tpu_custom_call.1} parent=1 // pred_check_branch
      %11 = sbr.rel (0) target = $region5
    $region4: #{tpu_custom_call.1} parent=1 // pred_region
      _
    $region5: #{tpu_custom_call.1} parent=1 // pred_fallthru
      _
    // Predicated region
    $region6: #{tpu_custom_call.1} parent=1 // pred_check
      _
    $region7: #{tpu_custom_call.1} parent=1 // pred_check_branch
      %13 = sbr.rel (0) target = $region9
    $region8: #{tpu_custom_call.1} parent=1 // pred_region
      _
    $region9: #{tpu_custom_call.1} parent=1 // pred_fallthru
      _
    // Predicated region
    $region10: #{tpu_custom_call.1} parent=1 // pred_check
      _
    $region11: #{tpu_custom_call.1} parent=1 // pred_check_branch
      %15 = sbr.rel (0) target = $region13
    $region12: #{tpu_custom_call.1} parent=1 // pred_region
      _
    $region13: #{tpu_custom_call.1} parent=1 // pred_fallthru
      _
    // Predicated region
    $region14: #{tpu_custom_call.1} parent=1 // pred_check
      _
    $region15: #{tpu_custom_call.1} parent=1 // pred_check_branch
      %17 = sbr.rel (0) target = $region17
    $region16: #{tpu_custom_call.1} parent=1 // pred_region
      _
    $region17: #{tpu_custom_call.1} parent=1 // pred_fallthru
      _
    %v18 = vld [vmem:[%s0] sm:$0xff]
    %v19 = vld [vmem:[%s0 + $0x8] sm:$0xff]
    %v20 = vld [vmem:[%s1] sm:$0xff]
    %v21 = vld [vmem:[%s1 + $0x8] sm:$0xff]
    %v22 = vld [vmem:[%s2] sm:$0x1]
    %v23 = vld [vmem:[%s2 + $0x1] sm:$0x1]
    %v24 = vld [vmem:[%s2 + $0x2] sm:$0x1]
    %v25 = vld [vmem:[%s3] sm:$0x1]
    %27 = vset.pattern.permute.xlu0 0
    %28 = vperm.xlu0 %27, %v18
    %v29 = vpop.permute.xlu0 %28
    %32 = vset.pattern.permute.xlu0 0
    %33 = vperm.xlu0 %32, %v19
    %v34 = vpop.permute.xlu0 %33
    %v36 = vlaneseq
    %v37 = vshrl.u32 %v36, 7
    %v38 = vsub.s32 0, %v37
    %v39 = vrot.slane %v22, %v38
    %v40 = vmul.f32 %v29, %v39
    %v41 = vmul.f32 %v34, %v39
    %42 = vset.pattern.permute.xlu0 1
    %43 = vperm.xlu0 %42, %v18
    %v44 = vpop.permute.xlu0 %43
    %46 = vset.pattern.permute.xlu0 1
    %47 = vperm.xlu0 %46, %v19
    %v48 = vpop.permute.xlu0 %47
    %v50 = vlaneseq
    %v51 = vshrl.u32 %v50, 7
    %v52 = vsub.s32 0, %v51
    %v53 = vrot.slane %v23, %v52
    %v54 = vmul.f32 %v44, %v53
    %v55 = vmul.f32 %v48, %v53
    %v56 = vadd.f32 %v40, %v54
    %v57 = vadd.f32 %v41, %v55
    %59 = vset.pattern.permute.xlu0 0
    %60 = vperm.xlu0 %59, %v20
    %v61 = vpop.permute.xlu0 %60
    %64 = vset.pattern.permute.xlu0 0
    %65 = vperm.xlu0 %64, %v21
    %v66 = vpop.permute.xlu0 %65
    %v68 = vlaneseq
    %v69 = vshrl.u32 %v68, 7
    %v70 = vsub.s32 0, %v69
    %v71 = vrot.slane %v24, %v70
    %v72 = vmul.f32 %v61, %v71
    %v73 = vmul.f32 %v66, %v71
    %v74 = vadd.f32 %v56, %v72
    %v75 = vadd.f32 %v57, %v73
    %v77 = vlaneseq
    %v78 = vshrl.u32 %v77, 7
    %v79 = vsub.s32 0, %v78
    %v80 = vrot.slane %v25, %v79
    %v82 = vadd.f32 %v74, %v80
    %v83 = vadd.f32 %v75, %v80
    %vm84 = vcmask 261120
    %85 = vst.msk [vmem:[#allocation2] sm:$0xff] %vm84, %v82
    %86 = vst.msk [vmem:[#allocation2 + $0x8] sm:$0xff] %vm84, %v83
    // Predicated region
    $region18: #{tpu_custom_call.1} parent=1 // pred_check
      _
    $region19: #{tpu_custom_call.1} parent=1 // pred_check_branch
      %88 = sbr.rel (0) target = $region21
    $region20: #{tpu_custom_call.1} parent=1 // pred_region
      %s90 = ssub.s32 256, 256
      %91 = vsyncadd [#allocation3], %s90
      %s92 = sshll.u32 [#allocation2], 4
      %s93 = int_to_ptr.vmem [resolvable:$true] %s92
      %98 = dma.vmem_to_hbm [thread:$0]  %s93, 256, %s4, [#allocation3], 128, 128, 8
    $region21: #{tpu_custom_call.1} parent=1 // pred_fallthru
      _
    // Predicated region
    $region22: #{tpu_custom_call.1} parent=1 // pred_check
      _
    $region23: #{tpu_custom_call.1} parent=1 // pred_check_branch
      %100 = sbr.rel (0) target = $region25
    $region24: #{tpu_custom_call.1} parent=1 // pred_region
      %101 = dma.done [#allocation3], 256
    $region25: #{tpu_custom_call.1} parent=1 // pred_fallthru
      _
    %102 = vsyncpa [#allocation3], 1

</llo_original>
